<compile_context>
chip_gen: v6e
topology: v6e:2x2x1
jax: 0.10.0
libtpu: 0.0.40
codegen_flags: <defaults>
</compile_context>

<pallas_src>
import functools

import jax
import jax.numpy as jnp
import numpy as np
from jax import lax
from jax.experimental import pallas as pl
from jax.experimental.pallas import tpu as pltpu


def mfm_conv_kernel(x_ref, w_ref, b_ref, o_ref, patches_ref, *,
                    c_inp, kh_sz, kw_sz, wp, n_base, ho, wo, c_out):
    """Per-image fused conv + MFM (transposed, lane-dense layout).

    x_ref:       (1, c_inp, LIN)   zero-padded image, flat (h*wp + w) lane layout
    w_ref:       (2*c_out, K)      K = kh_sz*kw_sz*c_inp, tap-major / channel-minor
    b_ref:       (2*c_out, 1)
    o_ref:       (1, c_out, ho*wo) NCHW-flat output block (lane-dense)
    patches_ref: (K, n_base)       VMEM scratch -- in-kernel im2col
    """
    # ---- in-kernel im2col: stack the KH*KW shifted views along sublanes -----
    for t in range(kh_sz * kw_sz):
        kh, kw = t // kw_sz, t % kw_sz
        d = kh * wp + kw                                  # static flat tap offset
        patches_ref[t * c_inp:(t + 1) * c_inp, :] = x_ref[0, :, d:d + n_base]

    # ---- single MXU pass: (2*c_out, K) @ (K, n_base), f32 accumulation ------
    acc = jnp.dot(w_ref[...], patches_ref[...],
                  preferred_element_type=jnp.float32)
    acc = acc + b_ref[...]                                # bias broadcast over lanes

    # ---- MFM: max of the two channel halves (pure sublane split) ------------
    mx = jnp.maximum(acc[:c_out, :], acc[c_out:, :]).astype(o_ref.dtype)

    # ---- compact padded-pitch rows (wp) to output-pitch rows (wo), NCHW-flat -
    for r in range(ho):
        o_ref[0, :, r * wo:(r + 1) * wo] = mx[:, r * wp:r * wp + wo]


def mfm_forward(x_nchw, w_oikk, bias, *, stride=1, padding=1):
    """mfm(type=1) forward.  x_nchw: (N, C_in, H, W) float32.
    w_oikk: (2*C_out, C_in, KH, KW) PyTorch-layout conv weight.  bias: (2*C_out,)."""
    N, C_in, H, W = x_nchw.shape
    O2, _, KH, KW = w_oikk.shape
    C_out = O2 // 2
    assert stride == 1, "this kernel implements the default stride=1 config"

    Hp, Wp = H + 2 * padding, W + 2 * padding
    Ho, Wo = Hp - KH + 1, Wp - KW + 1

    # pad channels up to a full 8-sublane tile so in-kernel tap stacking is aligned
    C_inp = ((C_in + 7) // 8) * 8
    K = KH * KW * C_inp
    n_base = Ho * Wp                                      # base positions computed per image
    max_d = (KH - 1) * Wp + (KW - 1)                      # largest static tap offset
    LIN = ((n_base + max_d + 127) // 128) * 128           # lane-padded flat image length

    # ---- glue: NCHW -> channel-padded, spatially padded, flattened ----------
    xp = jnp.pad(x_nchw, ((0, 0), (0, C_inp - C_in),
                          (padding, padding), (padding, padding)))
    xflat = xp.reshape(N, C_inp, Hp * Wp)
    xflat = jnp.pad(xflat, ((0, 0), (0, 0), (0, LIN - Hp * Wp)))

    # weight (O2, C_in, KH, KW) -> (O2, KH, KW, C_inp) -> (O2, K): tap-major rows
    wpad = jnp.pad(w_oikk, ((0, 0), (0, C_inp - C_in), (0, 0), (0, 0)))
    w_flat = jnp.transpose(wpad, (0, 2, 3, 1)).reshape(O2, K)
    b2d = bias.reshape(O2, 1)

    kernel = functools.partial(
        mfm_conv_kernel, c_inp=C_inp, kh_sz=KH, kw_sz=KW, wp=Wp,
        n_base=n_base, ho=Ho, wo=Wo, c_out=C_out)

    out = pl.pallas_call(
        kernel,
        out_shape=jax.ShapeDtypeStruct((N, C_out, Ho * Wo), x_nchw.dtype),
        grid_spec=pltpu.PrefetchScalarGridSpec(
            num_scalar_prefetch=0,
            grid=(N,),
            in_specs=[
                pl.BlockSpec((1, C_inp, LIN), lambda n: (n, 0, 0)),
                pl.BlockSpec((O2, K), lambda n: (0, 0)),
                pl.BlockSpec((O2, 1), lambda n: (0, 0)),
            ],
            out_specs=pl.BlockSpec((1, C_out, Ho * Wo), lambda n: (n, 0, 0)),
            scratch_shapes=[pltpu.VMEM((K, n_base), x_nchw.dtype)],
        ),
        compiler_params=pltpu.CompilerParams(
            dimension_semantics=("parallel",)),
    )(xflat, w_flat, b2d)

    # already NCHW-flat: this reshape is free (no transpose / copy pass)
    return out.reshape(N, C_out, Ho, Wo)


def mfm_reference(x_nchw, w_oikk, bias, *, stride=1, padding=1):
    """Pure-JAX reference (matches PyTorch Conv2d + split + max)."""
    x = jnp.transpose(x_nchw, (0, 2, 3, 1))               # NHWC
    w = jnp.transpose(w_oikk, (2, 3, 1, 0))               # HWIO
    y = lax.conv_general_dilated(
        x, w, window_strides=(stride, stride),
        padding=[(padding, padding), (padding, padding)],
        dimension_numbers=("NHWC", "HWIO", "NHWC"))
    y = y + bias.reshape(1, 1, 1, -1)
    c = y.shape[-1] // 2
    out = jnp.maximum(y[..., :c], y[..., c:])
    return jnp.transpose(out, (0, 3, 1, 2))               # NCHW


if __name__ == "__main__":
    # mfm(in_channels=4, out_channels=8, kernel_size=3, stride=1, padding=1, type=1)
    N, C_in, H, W = 2, 4, 16, 16
    C_out, KH, KW = 8, 3, 3

    key = jax.random.PRNGKey(0)
    kx, kw_, kb = jax.random.split(key, 3)
    x = jax.random.normal(kx, (N, C_in, H, W), dtype=jnp.float32)
    # deterministic synthetic parameters (PyTorch Conv2d weight layout: O,I,KH,KW)
    fan_in = C_in * KH * KW
    bound = 1.0 / np.sqrt(fan_in)
    w = jax.random.uniform(kw_, (2 * C_out, C_in, KH, KW),
                           minval=-bound, maxval=bound, dtype=jnp.float32)
    b = jax.random.uniform(kb, (2 * C_out,),
                           minval=-bound, maxval=bound, dtype=jnp.float32)

    run = jax.jit(functools.partial(mfm_forward, stride=1, padding=1))
    out = run(x, w, b)
    out = jax.block_until_ready(out)

    ref = jax.block_until_ready(mfm_reference(x, w, b))
    assert out.shape == (N, C_out, H, W), out.shape
    np.testing.assert_allclose(np.asarray(out), np.asarray(ref), atol=1e-5, rtol=1e-5)

    print("KERNEL_OK")
</pallas_src>

<mosaic_0001>
module attributes {stable_mosaic.version = 11 : i64} {
  func.func @mfm_conv_kernel(%arg0: i32, %arg1: memref<1x8x384xf32, #tpu.memory_space<vmem>>, %arg2: memref<16x72xf32, #tpu.memory_space<vmem>>, %arg3: memref<16x1xf32, #tpu.memory_space<vmem>>, %arg4: memref<1x8x256xf32, #tpu.memory_space<vmem>>, %arg5: memref<72x288xf32, #tpu.memory_space<vmem>>) attributes {dimension_semantics = [#tpu.dimension_semantics<parallel>], iteration_bounds = array<i64: 2>, scalar_prefetch = 0 : i64, scratch_operands = 1 : i64, tpu.core_type = #tpu.core_type<tc>, window_params = [{transform_indices = @transform_0, window_bounds = array<i64: 1, 8, 384>}, {pipeline_mode = #tpu.pipeline_mode<synchronous>, transform_indices = @transform_1, window_bounds = array<i64: 16, 72>}, {pipeline_mode = #tpu.pipeline_mode<synchronous>, transform_indices = @transform_2, window_bounds = array<i64: 16, 1>}, {transform_indices = @transform_3, window_bounds = array<i64: 1, 8, 256>}]} {
    %c0 = arith.constant 0 : index
    %c0_0 = arith.constant 0 : index
    %c0_1 = arith.constant 0 : index
    %0 = vector.load %arg1[%c0, %c0_0, %c0_1] : memref<1x8x384xf32, #tpu.memory_space<vmem>>, vector<1x8x288xf32>
    %1 = vector.shape_cast %0 : vector<1x8x288xf32> to vector<8x288xf32>
    %c0_2 = arith.constant 0 : index
    %c0_3 = arith.constant 0 : index
    %2 = vector.load %arg5[%c0_2, %c0_3] : memref<72x288xf32, #tpu.memory_space<vmem>>, vector<8x288xf32>
    tpu.vector_store %arg5[%c0_2, %c0_3], %1 {strides = array<i32>} : memref<72x288xf32, #tpu.memory_space<vmem>>, vector<8x288xf32>,
    %c0_4 = arith.constant 0 : index
    %c0_5 = arith.constant 0 : index
    %c1 = arith.constant 1 : index
    %3 = vector.load %arg1[%c0_4, %c0_5, %c1] : memref<1x8x384xf32, #tpu.memory_space<vmem>>, vector<1x8x288xf32>
    %4 = vector.shape_cast %3 : vector<1x8x288xf32> to vector<8x288xf32>
    %c8 = arith.constant 8 : index
    %c0_6 = arith.constant 0 : index
    %5 = vector.load %arg5[%c8, %c0_6] : memref<72x288xf32, #tpu.memory_space<vmem>>, vector<8x288xf32>
    tpu.vector_store %arg5[%c8, %c0_6], %4 {strides = array<i32>} : memref<72x288xf32, #tpu.memory_space<vmem>>, vector<8x288xf32>,
    %c0_7 = arith.constant 0 : index
    %c0_8 = arith.constant 0 : index
    %c2 = arith.constant 2 : index
    %6 = vector.load %arg1[%c0_7, %c0_8, %c2] : memref<1x8x384xf32, #tpu.memory_space<vmem>>, vector<1x8x288xf32>
    %7 = vector.shape_cast %6 : vector<1x8x288xf32> to vector<8x288xf32>
    %c16 = arith.constant 16 : index
    %c0_9 = arith.constant 0 : index
    %8 = vector.load %arg5[%c16, %c0_9] : memref<72x288xf32, #tpu.memory_space<vmem>>, vector<8x288xf32>
    tpu.vector_store %arg5[%c16, %c0_9], %7 {strides = array<i32>} : memref<72x288xf32, #tpu.memory_space<vmem>>, vector<8x288xf32>,
    %c0_10 = arith.constant 0 : index
    %c0_11 = arith.constant 0 : index
    %c18 = arith.constant 18 : index
    %9 = vector.load %arg1[%c0_10, %c0_11, %c18] : memref<1x8x384xf32, #tpu.memory_space<vmem>>, vector<1x8x288xf32>
    %10 = vector.shape_cast %9 : vector<1x8x288xf32> to vector<8x288xf32>
    %c24 = arith.constant 24 : index
    %c0_12 = arith.constant 0 : index
    %11 = vector.load %arg5[%c24, %c0_12] : memref<72x288xf32, #tpu.memory_space<vmem>>, vector<8x288xf32>
    tpu.vector_store %arg5[%c24, %c0_12], %10 {strides = array<i32>} : memref<72x288xf32, #tpu.memory_space<vmem>>, vector<8x288xf32>,
    %c0_13 = arith.constant 0 : index
    %c0_14 = arith.constant 0 : index
    %c19 = arith.constant 19 : index
    %12 = vector.load %arg1[%c0_13, %c0_14, %c19] : memref<1x8x384xf32, #tpu.memory_space<vmem>>, vector<1x8x288xf32>
    %13 = vector.shape_cast %12 : vector<1x8x288xf32> to vector<8x288xf32>
    %c32 = arith.constant 32 : index
    %c0_15 = arith.constant 0 : index
    %14 = vector.load %arg5[%c32, %c0_15] : memref<72x288xf32, #tpu.memory_space<vmem>>, vector<8x288xf32>
    tpu.vector_store %arg5[%c32, %c0_15], %13 {strides = array<i32>} : memref<72x288xf32, #tpu.memory_space<vmem>>, vector<8x288xf32>,
    %c0_16 = arith.constant 0 : index
    %c0_17 = arith.constant 0 : index
    %c20 = arith.constant 20 : index
    %15 = vector.load %arg1[%c0_16, %c0_17, %c20] : memref<1x8x384xf32, #tpu.memory_space<vmem>>, vector<1x8x288xf32>
    %16 = vector.shape_cast %15 : vector<1x8x288xf32> to vector<8x288xf32>
    %c40 = arith.constant 40 : index
    %c0_18 = arith.constant 0 : index
    %17 = vector.load %arg5[%c40, %c0_18] : memref<72x288xf32, #tpu.memory_space<vmem>>, vector<8x288xf32>
    tpu.vector_store %arg5[%c40, %c0_18], %16 {strides = array<i32>} : memref<72x288xf32, #tpu.memory_space<vmem>>, vector<8x288xf32>,
    %c0_19 = arith.constant 0 : index
    %c0_20 = arith.constant 0 : index
    %c36 = arith.constant 36 : index
    %18 = vector.load %arg1[%c0_19, %c0_20, %c36] : memref<1x8x384xf32, #tpu.memory_space<vmem>>, vector<1x8x288xf32>
    %19 = vector.shape_cast %18 : vector<1x8x288xf32> to vector<8x288xf32>
    %c48 = arith.constant 48 : index
    %c0_21 = arith.constant 0 : index
    %20 = vector.load %arg5[%c48, %c0_21] : memref<72x288xf32, #tpu.memory_space<vmem>>, vector<8x288xf32>
    tpu.vector_store %arg5[%c48, %c0_21], %19 {strides = array<i32>} : memref<72x288xf32, #tpu.memory_space<vmem>>, vector<8x288xf32>,
    %c0_22 = arith.constant 0 : index
    %c0_23 = arith.constant 0 : index
    %c37 = arith.constant 37 : index
    %21 = vector.load %arg1[%c0_22, %c0_23, %c37] : memref<1x8x384xf32, #tpu.memory_space<vmem>>, vector<1x8x288xf32>
    %22 = vector.shape_cast %21 : vector<1x8x288xf32> to vector<8x288xf32>
    %c56 = arith.constant 56 : index
    %c0_24 = arith.constant 0 : index
    %23 = vector.load %arg5[%c56, %c0_24] : memref<72x288xf32, #tpu.memory_space<vmem>>, vector<8x288xf32>
    tpu.vector_store %arg5[%c56, %c0_24], %22 {strides = array<i32>} : memref<72x288xf32, #tpu.memory_space<vmem>>, vector<8x288xf32>,
    %c0_25 = arith.constant 0 : index
    %c0_26 = arith.constant 0 : index
    %c38 = arith.constant 38 : index
    %24 = vector.load %arg1[%c0_25, %c0_26, %c38] : memref<1x8x384xf32, #tpu.memory_space<vmem>>, vector<1x8x288xf32>
    %25 = vector.shape_cast %24 : vector<1x8x288xf32> to vector<8x288xf32>
    %c64 = arith.constant 64 : index
    %c0_27 = arith.constant 0 : index
    %26 = vector.load %arg5[%c64, %c0_27] : memref<72x288xf32, #tpu.memory_space<vmem>>, vector<8x288xf32>
    tpu.vector_store %arg5[%c64, %c0_27], %25 {strides = array<i32>} : memref<72x288xf32, #tpu.memory_space<vmem>>, vector<8x288xf32>,
    %c0_28 = arith.constant 0 : index
    %c0_29 = arith.constant 0 : index
    %27 = vector.load %arg2[%c0_28, %c0_29] : memref<16x72xf32, #tpu.memory_space<vmem>>, vector<16x72xf32>
    %c0_30 = arith.constant 0 : index
    %c0_31 = arith.constant 0 : index
    %28 = vector.load %arg5[%c0_30, %c0_31] : memref<72x288xf32, #tpu.memory_space<vmem>>, vector<72x288xf32>
    %cst = arith.constant dense<0.000000e+00> : vector<16x288xf32>
    %29 = tpu.matmul %27, %28, %cst {dimension_numbers = #tpu.dot_dimension_numbers<[1], [0], [0], [1], [0, 0, 1, 1], [], []>} : vector<16x72xf32>, vector<72x288xf32>, vector<16x288xf32> -> vector<16x288xf32>
    %c0_32 = arith.constant 0 : index
    %c0_33 = arith.constant 0 : index
    %30 = vector.load %arg3[%c0_32, %c0_33] : memref<16x1xf32, #tpu.memory_space<vmem>>, vector<16x1xf32>
    %31 = vector.broadcast %30 : vector<16x1xf32> to vector<16x288xf32>
    %32 = arith.addf %29, %31 : vector<16x288xf32>
    %33 = vector.extract_strided_slice %32 {offsets = [0, 0], sizes = [8, 288], strides = [1, 1]} : vector<16x288xf32> to vector<8x288xf32>
    %34 = vector.extract_strided_slice %32 {offsets = [8, 0], sizes = [8, 288], strides = [1, 1]} : vector<16x288xf32> to vector<8x288xf32>
    %35 = arith.maximumf %33, %34 : vector<8x288xf32>
    %36 = vector.extract_strided_slice %35 {offsets = [0, 0], sizes = [8, 16], strides = [1, 1]} : vector<8x288xf32> to vector<8x16xf32>
    %c0_34 = arith.constant 0 : index
    %c0_35 = arith.constant 0 : index
    %c0_36 = arith.constant 0 : index
    %37 = vector.load %arg4[%c0_34, %c0_35, %c0_36] : memref<1x8x256xf32, #tpu.memory_space<vmem>>, vector<1x8x16xf32>
    %38 = vector.shape_cast %37 : vector<1x8x16xf32> to vector<8x16xf32>
    %39 = vector.shape_cast %36 : vector<8x16xf32> to vector<1x8x16xf32>
    tpu.vector_store %arg4[%c0_34, %c0_35, %c0_36], %39 {strides = array<i32>} : memref<1x8x256xf32, #tpu.memory_space<vmem>>, vector<1x8x16xf32>,
    %40 = vector.extract_strided_slice %35 {offsets = [0, 18], sizes = [8, 16], strides = [1, 1]} : vector<8x288xf32> to vector<8x16xf32>
    %c0_37 = arith.constant 0 : index
    %c0_38 = arith.constant 0 : index
    %c16_39 = arith.constant 16 : index
    %41 = vector.load %arg4[%c0_37, %c0_38, %c16_39] : memref<1x8x256xf32, #tpu.memory_space<vmem>>, vector<1x8x16xf32>
    %42 = vector.shape_cast %41 : vector<1x8x16xf32> to vector<8x16xf32>
    %43 = vector.shape_cast %40 : vector<8x16xf32> to vector<1x8x16xf32>
    tpu.vector_store %arg4[%c0_37, %c0_38, %c16_39], %43 {strides = array<i32>} : memref<1x8x256xf32, #tpu.memory_space<vmem>>, vector<1x8x16xf32>,
    %44 = vector.extract_strided_slice %35 {offsets = [0, 36], sizes = [8, 16], strides = [1, 1]} : vector<8x288xf32> to vector<8x16xf32>
    %c0_40 = arith.constant 0 : index
    %c0_41 = arith.constant 0 : index
    %c32_42 = arith.constant 32 : index
    %45 = vector.load %arg4[%c0_40, %c0_41, %c32_42] : memref<1x8x256xf32, #tpu.memory_space<vmem>>, vector<1x8x16xf32>
    %46 = vector.shape_cast %45 : vector<1x8x16xf32> to vector<8x16xf32>
    %47 = vector.shape_cast %44 : vector<8x16xf32> to vector<1x8x16xf32>
    tpu.vector_store %arg4[%c0_40, %c0_41, %c32_42], %47 {strides = array<i32>} : memref<1x8x256xf32, #tpu.memory_space<vmem>>, vector<1x8x16xf32>,
    %48 = vector.extract_strided_slice %35 {offsets = [0, 54], sizes = [8, 16], strides = [1, 1]} : vector<8x288xf32> to vector<8x16xf32>
    %c0_43 = arith.constant 0 : index
    %c0_44 = arith.constant 0 : index
    %c48_45 = arith.constant 48 : index
    %49 = vector.load %arg4[%c0_43, %c0_44, %c48_45] : memref<1x8x256xf32, #tpu.memory_space<vmem>>, vector<1x8x16xf32>
    %50 = vector.shape_cast %49 : vector<1x8x16xf32> to vector<8x16xf32>
    %51 = vector.shape_cast %48 : vector<8x16xf32> to vector<1x8x16xf32>
    tpu.vector_store %arg4[%c0_43, %c0_44, %c48_45], %51 {strides = array<i32>} : memref<1x8x256xf32, #tpu.memory_space<vmem>>, vector<1x8x16xf32>,
    %52 = vector.extract_strided_slice %35 {offsets = [0, 72], sizes = [8, 16], strides = [1, 1]} : vector<8x288xf32> to vector<8x16xf32>
    %c0_46 = arith.constant 0 : index
    %c0_47 = arith.constant 0 : index
    %c64_48 = arith.constant 64 : index
    %53 = vector.load %arg4[%c0_46, %c0_47, %c64_48] : memref<1x8x256xf32, #tpu.memory_space<vmem>>, vector<1x8x16xf32>
    %54 = vector.shape_cast %53 : vector<1x8x16xf32> to vector<8x16xf32>
    %55 = vector.shape_cast %52 : vector<8x16xf32> to vector<1x8x16xf32>
    tpu.vector_store %arg4[%c0_46, %c0_47, %c64_48], %55 {strides = array<i32>} : memref<1x8x256xf32, #tpu.memory_space<vmem>>, vector<1x8x16xf32>,
    %56 = vector.extract_strided_slice %35 {offsets = [0, 90], sizes = [8, 16], strides = [1, 1]} : vector<8x288xf32> to vector<8x16xf32>
    %c0_49 = arith.constant 0 : index
    %c0_50 = arith.constant 0 : index
    %c80 = arith.constant 80 : index
    %57 = vector.load %arg4[%c0_49, %c0_50, %c80] : memref<1x8x256xf32, #tpu.memory_space<vmem>>, vector<1x8x16xf32>
    %58 = vector.shape_cast %57 : vector<1x8x16xf32> to vector<8x16xf32>
    %59 = vector.shape_cast %56 : vector<8x16xf32> to vector<1x8x16xf32>
    tpu.vector_store %arg4[%c0_49, %c0_50, %c80], %59 {strides = array<i32>} : memref<1x8x256xf32, #tpu.memory_space<vmem>>, vector<1x8x16xf32>,
    %60 = vector.extract_strided_slice %35 {offsets = [0, 108], sizes = [8, 16], strides = [1, 1]} : vector<8x288xf32> to vector<8x16xf32>
    %c0_51 = arith.constant 0 : index
    %c0_52 = arith.constant 0 : index
    %c96 = arith.constant 96 : index
    %61 = vector.load %arg4[%c0_51, %c0_52, %c96] : memref<1x8x256xf32, #tpu.memory_space<vmem>>, vector<1x8x16xf32>
    %62 = vector.shape_cast %61 : vector<1x8x16xf32> to vector<8x16xf32>
    %63 = vector.shape_cast %60 : vector<8x16xf32> to vector<1x8x16xf32>
    tpu.vector_store %arg4[%c0_51, %c0_52, %c96], %63 {strides = array<i32>} : memref<1x8x256xf32, #tpu.memory_space<vmem>>, vector<1x8x16xf32>,
    %64 = vector.extract_strided_slice %35 {offsets = [0, 126], sizes = [8, 16], strides = [1, 1]} : vector<8x288xf32> to vector<8x16xf32>
    %c0_53 = arith.constant 0 : index
    %c0_54 = arith.constant 0 : index
    %c112 = arith.constant 112 : index
    %65 = vector.load %arg4[%c0_53, %c0_54, %c112] : memref<1x8x256xf32, #tpu.memory_space<vmem>>, vector<1x8x16xf32>
    %66 = vector.shape_cast %65 : vector<1x8x16xf32> to vector<8x16xf32>
    %67 = vector.shape_cast %64 : vector<8x16xf32> to vector<1x8x16xf32>
    tpu.vector_store %arg4[%c0_53, %c0_54, %c112], %67 {strides = array<i32>} : memref<1x8x256xf32, #tpu.memory_space<vmem>>, vector<1x8x16xf32>,
    %68 = vector.extract_strided_slice %35 {offsets = [0, 144], sizes = [8, 16], strides = [1, 1]} : vector<8x288xf32> to vector<8x16xf32>
    %c0_55 = arith.constant 0 : index
    %c0_56 = arith.constant 0 : index
    %c128 = arith.constant 128 : index
    %69 = vector.load %arg4[%c0_55, %c0_56, %c128] : memref<1x8x256xf32, #tpu.memory_space<vmem>>, vector<1x8x16xf32>
    %70 = vector.shape_cast %69 : vector<1x8x16xf32> to vector<8x16xf32>
    %71 = vector.shape_cast %68 : vector<8x16xf32> to vector<1x8x16xf32>
    tpu.vector_store %arg4[%c0_55, %c0_56, %c128], %71 {strides = array<i32>} : memref<1x8x256xf32, #tpu.memory_space<vmem>>, vector<1x8x16xf32>,
    %72 = vector.extract_strided_slice %35 {offsets = [0, 162], sizes = [8, 16], strides = [1, 1]} : vector<8x288xf32> to vector<8x16xf32>
    %c0_57 = arith.constant 0 : index
    %c0_58 = arith.constant 0 : index
    %c144 = arith.constant 144 : index
    %73 = vector.load %arg4[%c0_57, %c0_58, %c144] : memref<1x8x256xf32, #tpu.memory_space<vmem>>, vector<1x8x16xf32>
    %74 = vector.shape_cast %73 : vector<1x8x16xf32> to vector<8x16xf32>
    %75 = vector.shape_cast %72 : vector<8x16xf32> to vector<1x8x16xf32>
    tpu.vector_store %arg4[%c0_57, %c0_58, %c144], %75 {strides = array<i32>} : memref<1x8x256xf32, #tpu.memory_space<vmem>>, vector<1x8x16xf32>,
    %76 = vector.extract_strided_slice %35 {offsets = [0, 180], sizes = [8, 16], strides = [1, 1]} : vector<8x288xf32> to vector<8x16xf32>
    %c0_59 = arith.constant 0 : index
    %c0_60 = arith.constant 0 : index
    %c160 = arith.constant 160 : index
    %77 = vector.load %arg4[%c0_59, %c0_60, %c160] : memref<1x8x256xf32, #tpu.memory_space<vmem>>, vector<1x8x16xf32>
    %78 = vector.shape_cast %77 : vector<1x8x16xf32> to vector<8x16xf32>
    %79 = vector.shape_cast %76 : vector<8x16xf32> to vector<1x8x16xf32>
    tpu.vector_store %arg4[%c0_59, %c0_60, %c160], %79 {strides = array<i32>} : memref<1x8x256xf32, #tpu.memory_space<vmem>>, vector<1x8x16xf32>,
    %80 = vector.extract_strided_slice %35 {offsets = [0, 198], sizes = [8, 16], strides = [1, 1]} : vector<8x288xf32> to vector<8x16xf32>
    %c0_61 = arith.constant 0 : index
    %c0_62 = arith.constant 0 : index
    %c176 = arith.constant 176 : index
    %81 = vector.load %arg4[%c0_61, %c0_62, %c176] : memref<1x8x256xf32, #tpu.memory_space<vmem>>, vector<1x8x16xf32>
    %82 = vector.shape_cast %81 : vector<1x8x16xf32> to vector<8x16xf32>
    %83 = vector.shape_cast %80 : vector<8x16xf32> to vector<1x8x16xf32>
    tpu.vector_store %arg4[%c0_61, %c0_62, %c176], %83 {strides = array<i32>} : memref<1x8x256xf32, #tpu.memory_space<vmem>>, vector<1x8x16xf32>,
    %84 = vector.extract_strided_slice %35 {offsets = [0, 216], sizes = [8, 16], strides = [1, 1]} : vector<8x288xf32> to vector<8x16xf32>
    %c0_63 = arith.constant 0 : index
    %c0_64 = arith.constant 0 : index
    %c192 = arith.constant 192 : index
    %85 = vector.load %arg4[%c0_63, %c0_64, %c192] : memref<1x8x256xf32, #tpu.memory_space<vmem>>, vector<1x8x16xf32>
    %86 = vector.shape_cast %85 : vector<1x8x16xf32> to vector<8x16xf32>
    %87 = vector.shape_cast %84 : vector<8x16xf32> to vector<1x8x16xf32>
    tpu.vector_store %arg4[%c0_63, %c0_64, %c192], %87 {strides = array<i32>} : memref<1x8x256xf32, #tpu.memory_space<vmem>>, vector<1x8x16xf32>,
    %88 = vector.extract_strided_slice %35 {offsets = [0, 234], sizes = [8, 16], strides = [1, 1]} : vector<8x288xf32> to vector<8x16xf32>
    %c0_65 = arith.constant 0 : index
    %c0_66 = arith.constant 0 : index
    %c208 = arith.constant 208 : index
    %89 = vector.load %arg4[%c0_65, %c0_66, %c208] : memref<1x8x256xf32, #tpu.memory_space<vmem>>, vector<1x8x16xf32>
    %90 = vector.shape_cast %89 : vector<1x8x16xf32> to vector<8x16xf32>
    %91 = vector.shape_cast %88 : vector<8x16xf32> to vector<1x8x16xf32>
    tpu.vector_store %arg4[%c0_65, %c0_66, %c208], %91 {strides = array<i32>} : memref<1x8x256xf32, #tpu.memory_space<vmem>>, vector<1x8x16xf32>,
    %92 = vector.extract_strided_slice %35 {offsets = [0, 252], sizes = [8, 16], strides = [1, 1]} : vector<8x288xf32> to vector<8x16xf32>
    %c0_67 = arith.constant 0 : index
    %c0_68 = arith.constant 0 : index
    %c224 = arith.constant 224 : index
    %93 = vector.load %arg4[%c0_67, %c0_68, %c224] : memref<1x8x256xf32, #tpu.memory_space<vmem>>, vector<1x8x16xf32>
    %94 = vector.shape_cast %93 : vector<1x8x16xf32> to vector<8x16xf32>
    %95 = vector.shape_cast %92 : vector<8x16xf32> to vector<1x8x16xf32>
    tpu.vector_store %arg4[%c0_67, %c0_68, %c224], %95 {strides = array<i32>} : memref<1x8x256xf32, #tpu.memory_space<vmem>>, vector<1x8x16xf32>,
    %96 = vector.extract_strided_slice %35 {offsets = [0, 270], sizes = [8, 16], strides = [1, 1]} : vector<8x288xf32> to vector<8x16xf32>
    %c0_69 = arith.constant 0 : index
    %c0_70 = arith.constant 0 : index
    %c240 = arith.constant 240 : index
    %97 = vector.load %arg4[%c0_69, %c0_70, %c240] : memref<1x8x256xf32, #tpu.memory_space<vmem>>, vector<1x8x16xf32>
    %98 = vector.shape_cast %97 : vector<1x8x16xf32> to vector<8x16xf32>
    %99 = vector.shape_cast %96 : vector<8x16xf32> to vector<1x8x16xf32>
    tpu.vector_store %arg4[%c0_69, %c0_70, %c240], %99 {strides = array<i32>} : memref<1x8x256xf32, #tpu.memory_space<vmem>>, vector<1x8x16xf32>,
    return
  }
  func.func @transform_0(%arg0: i32) -> (i32, i32, i32) {
    %c0_i32 = arith.constant 0 : i32
    %c0_i32_0 = arith.constant 0 : i32
    %c0_i32_1 = arith.constant 0 : i32
    return %arg0, %c0_i32, %c0_i32_0 : i32, i32, i32
  }
  func.func @transform_1(%arg0: i32) -> (i32, i32) {
    %c0_i32 = arith.constant 0 : i32
    %c0_i32_0 = arith.constant 0 : i32
    %c0_i32_1 = arith.constant 0 : i32
    return %c0_i32, %c0_i32_0 : i32, i32
  }
  func.func @transform_2(%arg0: i32) -> (i32, i32) {
    %c0_i32 = arith.constant 0 : i32
    %c0_i32_0 = arith.constant 0 : i32
    %c0_i32_1 = arith.constant 0 : i32
    return %c0_i32, %c0_i32_0 : i32, i32
  }
  func.func @transform_3(%arg0: i32) -> (i32, i32, i32) {
    %c0_i32 = arith.constant 0 : i32
    %c0_i32_0 = arith.constant 0 : i32
    %c0_i32_1 = arith.constant 0 : i32
    return %arg0, %c0_i32, %c0_i32_0 : i32, i32, i32
  }
}

</mosaic_0001>

<llo_original>
// kernel: mfm_forward.1
$region0: #{mfm_forward.1}
  #allocation0 [shape = 'u32[]', space=smem, size = 0x4, offset = 0x4, fixed_abs, tag = 'smem constant byte address 0x4 - core index']
  #allocation1 [shape = 'u32[144,128]{1,0:T(1,128)}', space=vmem, size = 0x12000, scoped, tag = 'internal scratch']
  #allocation2 [shape = 'f32[72,288]{1,0:T(8,128)}', space=vmem, size = 0x1b000, scoped, tag = 'scratch operand']
  %s0 = inlined_call_operand.vmem [shape: f32[2,8,384], index: 0, kind: input, shape index: {}]
  %s1 = inlined_call_operand.vmem [shape: f32[16,72], index: 1, kind: input, shape index: {}]
  %s2 = inlined_call_operand.vmem [shape: f32[16,1], index: 2, kind: input, shape index: {}]
  %s3 = inlined_call_operand.vmem [shape: f32[2,8,256], index: 3, kind: output, shape index: {}]
  %s4 = sld [smem:[#allocation0]]
  $region45: #{mfm_forward.1} parent=0
    _
  %s6 = ssub.s32 1, %s4
  %s7 = scalar_select 0, %s6, %s4
  loop: start=0, step=1, limit=4
  $region2: #{mfm_forward.1} parent=0 // loop_pre_header
    _
  $region3: #{mfm_forward.1} parent=0 // loop_header
    %s9 = sphi 0, %s13
    %p10 = scmp.ge.s32.totalorder %s9, 4
    %s19 = sphi 0, %s21
    %s22 = sphi 0, %s19
    %s23 = sphi 0, %s22
    %s39 = sphi 0, %s23
    %s43 = sphi 0, %s43
    %s45 = sphi 0, %s43
    %s46 = sphi 0, %s45
    %s60 = sphi 0, %s46
    %s64 = sphi 0, %s64
    %s66 = sphi 0, %s64
    %s67 = sphi 0, %s66
    %s81 = sphi 0, %s67
    %s87 = sphi 0, %s89
    %s90 = sphi 0, %s87
    %s91 = sphi 0, %s90
    %s107 = sphi 0, %s91
  $region4: #{mfm_forward.1} parent=0 // loop_header_branch
    %12 = sbr.rel (%p10) target = $region8
  $region5: #{mfm_forward.1} parent=0 // loop_body
    %s14 = ssub.s32 %s9, 1
    %s15 = ssub.s32 %s9, 2
    %s16 = sadd.s32 %s9, 1
    %s17 = ssub.s32 %s9, %s16
    %p18 = scmp.eq.s32.totalorder %s17, 0
    %s20 = sadd.s32 %s19, 1
    %s21 = scalar_select %p18, %s19, %s20
    %p24 = pneg %p18
    %p25 = scmp.eq.s32.totalorder %s9, 1
    %p26 = por %p24, %p25
    %p27 = scmp.ne.s32.totalorder %s19, %s22
    %p28 = scmp.eq.s32.totalorder %s9, 0
    %p29 = por %p27, %p28
    %p30 = scmp.ne.s32.totalorder %s19, %s22
    %p31 = scmp.eq.s32.totalorder %s14, 1
    %p32 = por %p30, %p31
    %p33 = scmp.ne.s32.totalorder %s22, %s23
    %p34 = scmp.eq.s32.totalorder %s14, 0
    %p35 = por %p33, %p34
    %p36 = scmp.ne.s32.totalorder %s22, %s23
    %p37 = scmp.eq.s32.totalorder %s15, 1
    %p38 = por %p36, %p37
    %p40 = scmp.ne.s32.totalorder %s23, %s39
    %p41 = scmp.eq.s32.totalorder %s15, 0
    %p42 = por %p40, %p41
    %s44 = sadd.s32 %s43, 1
    %p47 = scmp.eq.s32.totalorder %s9, 1
    %p48 = scmp.ne.s32.totalorder %s43, %s45
    %p49 = scmp.eq.s32.totalorder %s9, 0
    %p50 = por %p48, %p49
    %p51 = scmp.ne.s32.totalorder %s43, %s45
    %p52 = scmp.eq.s32.totalorder %s14, 1
    %p53 = por %p51, %p52
    %p54 = scmp.ne.s32.totalorder %s45, %s46
    %p55 = scmp.eq.s32.totalorder %s14, 0
    %p56 = por %p54, %p55
    %p57 = scmp.ne.s32.totalorder %s45, %s46
    %p58 = scmp.eq.s32.totalorder %s15, 1
    %p59 = por %p57, %p58
    %p61 = scmp.ne.s32.totalorder %s46, %s60
    %p62 = scmp.eq.s32.totalorder %s15, 0
    %p63 = por %p61, %p62
    %s65 = sadd.s32 %s64, 1
    %p68 = scmp.eq.s32.totalorder %s9, 1
    %p69 = scmp.ne.s32.totalorder %s64, %s66
    %p70 = scmp.eq.s32.totalorder %s9, 0
    %p71 = por %p69, %p70
    %p72 = scmp.ne.s32.totalorder %s64, %s66
    %p73 = scmp.eq.s32.totalorder %s14, 1
    %p74 = por %p72, %p73
    %p75 = scmp.ne.s32.totalorder %s66, %s67
    %p76 = scmp.eq.s32.totalorder %s14, 0
    %p77 = por %p75, %p76
    %p78 = scmp.ne.s32.totalorder %s66, %s67
    %p79 = scmp.eq.s32.totalorder %s15, 1
    %p80 = por %p78, %p79
    %p82 = scmp.ne.s32.totalorder %s67, %s81
    %p83 = scmp.eq.s32.totalorder %s15, 0
    %p84 = por %p82, %p83
    %s85 = ssub.s32 %s9, %s16
    %p86 = scmp.eq.s32.totalorder %s85, 0
    %s88 = sadd.s32 %s87, 1
    %s89 = scalar_select %p86, %s87, %s88
    %p92 = pneg %p86
    %p93 = scmp.eq.s32.totalorder %s9, 1
    %p94 = por %p92, %p93
    %p95 = scmp.ne.s32.totalorder %s87, %s90
    %p96 = scmp.eq.s32.totalorder %s9, 0
    %p97 = por %p95, %p96
    %p98 = scmp.ne.s32.totalorder %s87, %s90
    %p99 = scmp.eq.s32.totalorder %s14, 1
    %p100 = por %p98, %p99
    %p101 = scmp.ne.s32.totalorder %s90, %s91
    %p102 = scmp.eq.s32.totalorder %s14, 0
    %p103 = por %p101, %p102
    %p104 = scmp.ne.s32.totalorder %s90, %s91
    %p105 = scmp.eq.s32.totalorder %s15, 1
    %p106 = por %p104, %p105
    %p108 = scmp.ne.s32.totalorder %s91, %s107
    %p109 = scmp.eq.s32.totalorder %s15, 0
    %p110 = por %p108, %p109
    %p111 = scmp.le.s32.totalorder 1, %s9
    %p112 = scmp.lt.s32.totalorder %s9, 3
    %p113 = pnand %p111, %p112
    %p114 = pneg %p113
    // Predicated region
    $region9: #{mfm_forward.1} parent=5 // pred_check
      _
    $region10: #{mfm_forward.1} parent=5 // pred_check_branch
      %116 = sbr.rel (%p113) target = $region12
    $region11: #{mfm_forward.1} parent=5 // pred_region
      %s117 = ssub.s32 %s9, 1
      // Predicated region
      $region13: #{mfm_forward.1} parent=11 // pred_check
        %p118 = pneg %p56
      $region14: #{mfm_forward.1} parent=11 // pred_check_branch
        %120 = sbr.rel (%p118) target = $region16
      $region15: #{mfm_forward.1} parent=11 // pred_region
        _
      $region16: #{mfm_forward.1} parent=11 // pred_fallthru
        _
      // Predicated region
      $region17: #{mfm_forward.1} parent=11 // pred_check
        %p121 = pneg %p77
      $region18: #{mfm_forward.1} parent=11 // pred_check_branch
        %123 = sbr.rel (%p121) target = $region20
      $region19: #{mfm_forward.1} parent=11 // pred_region
        _
      $region20: #{mfm_forward.1} parent=11 // pred_fallthru
        _
    $region12: #{mfm_forward.1} parent=5 // pred_fallthru
      _
    %p124 = scmp.lt.s32.totalorder %s9, 2
    // Predicated region
    $region21: #{mfm_forward.1} parent=5 // pred_check
      %p125 = pneg %p124
    $region22: #{mfm_forward.1} parent=5 // pred_check_branch
      %127 = sbr.rel (%p125) target = $region24
    $region23: #{mfm_forward.1} parent=5 // pred_region
      // Predicated region
      $region25: #{mfm_forward.1} parent=23 // pred_check
        %p128 = pneg %p29
      $region26: #{mfm_forward.1} parent=23 // pred_check_branch
        %130 = sbr.rel (%p128) target = $region28
      $region27: #{mfm_forward.1} parent=23 // pred_region
        %p131 = scmp.lt.s32.totalorder %s9, 1
        %s132 = scalar_select %p131, %s9, 1
        %s133 = smul.addr %s132, 3
        %s134 = smul.addr %s133, 8
        %s135 = scalar_lea.vmem %s0, %s134
      $region28: #{mfm_forward.1} parent=23 // pred_fallthru
        _
    $region24: #{mfm_forward.1} parent=5 // pred_fallthru
      _
    %p136 = scmp.le.s32.totalorder 1, %s9
    %p137 = scmp.lt.s32.totalorder %s9, 3
    %p138 = pnand %p136, %p137
    %p139 = pneg %p138
    // Predicated region
    $region29: #{mfm_forward.1} parent=5 // pred_check
      _
    $region30: #{mfm_forward.1} parent=5 // pred_check_branch
      %141 = sbr.rel (%p138) target = $region32
    $region31: #{mfm_forward.1} parent=5 // pred_region
      %s142 = ssub.s32 %s9, 1
      %p143 = scmp.lt.s32.totalorder %s14, 1
      %s144 = scalar_select %p143, %s14, 1
      %s145 = smul.addr %s144, 3
      %s146 = smul.addr %s145, 8
      %s147 = scalar_lea.vmem %s0, %s146
      %p148 = pneg %p35
      %p149 = pneg %p32
      %p150 = pneg %p56
      %p151 = pneg %p53
      %p152 = pneg %p77
      %p153 = pneg %p74
      %p154 = pneg %p103
      %p155 = pneg %p100
      %p156 = scmp.lt.s32.totalorder %s14, 1
      %s157 = scalar_select %p156, %s14, 1
      %s158 = smul.addr %s157, 2
      %s159 = smul.addr %s158, 8
      %s160 = scalar_lea.vmem %s3, %s159
      %p161 = scmp.lt.s32.totalorder %s14, 1
      %s162 = scalar_select %p161, %s14, 1
      %s163 = smul.addr %s162, 3
      %s164 = smul.addr %s163, 8
      %s165 = scalar_lea.vmem %s0, %s164
      %p166 = scmp.lt.s32.totalorder %s14, 1
      %s167 = scalar_select %p166, %s14, 1
      %s168 = smul.addr %s167, 2
      %s169 = smul.addr %s168, 8
      %s170 = scalar_lea.vmem %s3, %s169
      %v171 = vld [vmem:[%s165] sm:$0xff]
      %v172 = vld [vmem:[%s165 + $0x8] sm:$0xff]
      %v173 = vld [vmem:[%s165 + $0x10] sm:$0xff]
      %174 = vst [vmem:[#allocation2] sm:$0xff] %v171
      %175 = vst [vmem:[#allocation2 + $0x8] sm:$0xff] %v172
      %vm176 = vcmask 261120
      %177 = vst.msk [vmem:[#allocation2 + $0x10] sm:$0xff] %vm176, %v173
      %v178 = vld [vmem:[%s165] sm:$0xff]
      %v179 = vld [vmem:[%s165 + $0x8] sm:$0xff]
      %v180 = vld [vmem:[%s165 + $0x10] sm:$0xff]
      %184 = vrot.lane.b32.xlu0 %v178, 127
      %v185 = vpop.permute.xlu0 %184
      %186 = vrot.lane.b32.xlu0 %v179, 127
      %v187 = vpop.permute.xlu0 %186
      %188 = vrot.lane.b32.xlu0 %v180, 127
      %v189 = vpop.permute.xlu0 %188
      %vm190 = vcmask 1039360
      %v191 = vsel %vm190, %v185, %v187
      %v192 = vsel %vm190, %v187, %v189
      %196 = vst [vmem:[#allocation2 + $0x18] sm:$0xff] %v191
      %197 = vst [vmem:[#allocation2 + $0x20] sm:$0xff] %v192
      %198 = vst.msk [vmem:[#allocation2 + $0x28] sm:$0xff] %vm176, %v189
      %v199 = vld [vmem:[%s165] sm:$0xff]
      %v200 = vld [vmem:[%s165 + $0x8] sm:$0xff]
      %v201 = vld [vmem:[%s165 + $0x10] sm:$0xff]
      %205 = vrot.lane.b32.xlu0 %v199, 126
      %v206 = vpop.permute.xlu0 %205
      %207 = vrot.lane.b32.xlu0 %v200, 126
      %v208 = vpop.permute.xlu0 %207
      %209 = vrot.lane.b32.xlu0 %v201, 126
      %v210 = vpop.permute.xlu0 %209
      %vm211 = vcmask 1031168
      %v212 = vsel %vm211, %v206, %v208
      %v213 = vsel %vm211, %v208, %v210
      %217 = vst [vmem:[#allocation2 + $0x30] sm:$0xff] %v212
      %218 = vst [vmem:[#allocation2 + $0x38] sm:$0xff] %v213
      %219 = vst.msk [vmem:[#allocation2 + $0x40] sm:$0xff] %vm176, %v210
      %v220 = vld [vmem:[%s165] sm:$0xff]
      %v221 = vld [vmem:[%s165 + $0x8] sm:$0xff]
      %v222 = vld [vmem:[%s165 + $0x10] sm:$0xff]
      %226 = vrot.lane.b32.xlu0 %v220, 110
      %v227 = vpop.permute.xlu0 %226
      %228 = vrot.lane.b32.xlu0 %v221, 110
      %v229 = vpop.permute.xlu0 %228
      %230 = vrot.lane.b32.xlu0 %v222, 110
      %v231 = vpop.permute.xlu0 %230
      %vm232 = vcmask 900096
      %v233 = vsel %vm232, %v227, %v229
      %v234 = vsel %vm232, %v229, %v231
      %238 = vst [vmem:[#allocation2 + $0x48] sm:$0xff] %v233
      %239 = vst [vmem:[#allocation2 + $0x50] sm:$0xff] %v234
      %240 = vst.msk [vmem:[#allocation2 + $0x58] sm:$0xff] %vm176, %v231
      %v241 = vld [vmem:[%s165] sm:$0xff]
      %v242 = vld [vmem:[%s165 + $0x8] sm:$0xff]
      %v243 = vld [vmem:[%s165 + $0x10] sm:$0xff]
      %247 = vrot.lane.b32.xlu0 %v241, 109
      %v248 = vpop.permute.xlu0 %247
      %249 = vrot.lane.b32.xlu0 %v242, 109
      %v250 = vpop.permute.xlu0 %249
      %251 = vrot.lane.b32.xlu0 %v243, 109
      %v252 = vpop.permute.xlu0 %251
      %vm253 = vcmask 891904
      %v254 = vsel %vm253, %v248, %v250
      %v255 = vsel %vm253, %v250, %v252
      %259 = vst [vmem:[#allocation2 + $0x60] sm:$0xff] %v254
      %260 = vst [vmem:[#allocation2 + $0x68] sm:$0xff] %v255
      %261 = vst.msk [vmem:[#allocation2 + $0x70] sm:$0xff] %vm176, %v252
      %v262 = vld [vmem:[%s165] sm:$0xff]
      %v263 = vld [vmem:[%s165 + $0x8] sm:$0xff]
      %v264 = vld [vmem:[%s165 + $0x10] sm:$0xff]
      %268 = vrot.lane.b32.xlu0 %v262, 108
      %v269 = vpop.permute.xlu0 %268
      %270 = vrot.lane.b32.xlu0 %v263, 108
      %v271 = vpop.permute.xlu0 %270
      %272 = vrot.lane.b32.xlu0 %v264, 108
      %v273 = vpop.permute.xlu0 %272
      %vm274 = vcmask 883712
      %v275 = vsel %vm274, %v269, %v271
      %v276 = vsel %vm274, %v271, %v273
      %280 = vst [vmem:[#allocation2 + $0x78] sm:$0xff] %v275
      %281 = vst [vmem:[#allocation2 + $0x80] sm:$0xff] %v276
      %282 = vst.msk [vmem:[#allocation2 + $0x88] sm:$0xff] %vm176, %v273
      %v283 = vld [vmem:[%s165] sm:$0xff]
      %v284 = vld [vmem:[%s165 + $0x8] sm:$0xff]
      %v285 = vld [vmem:[%s165 + $0x10] sm:$0xff]
      %289 = vrot.lane.b32.xlu0 %v283, 92
      %v290 = vpop.permute.xlu0 %289
      %291 = vrot.lane.b32.xlu0 %v284, 92
      %v292 = vpop.permute.xlu0 %291
      %293 = vrot.lane.b32.xlu0 %v285, 92
      %v294 = vpop.permute.xlu0 %293
      %vm295 = vcmask 752640
      %v296 = vsel %vm295, %v290, %v292
      %v297 = vsel %vm295, %v292, %v294
      %301 = vst [vmem:[#allocation2 + $0x90] sm:$0xff] %v296
      %302 = vst [vmem:[#allocation2 + $0x98] sm:$0xff] %v297
      %303 = vst.msk [vmem:[#allocation2 + $0xa0] sm:$0xff] %vm176, %v294
      %v304 = vld [vmem:[%s165] sm:$0xff]
      %v305 = vld [vmem:[%s165 + $0x8] sm:$0xff]
      %v306 = vld [vmem:[%s165 + $0x10] sm:$0xff]
      %310 = vrot.lane.b32.xlu0 %v304, 91
      %v311 = vpop.permute.xlu0 %310
      %312 = vrot.lane.b32.xlu0 %v305, 91
      %v313 = vpop.permute.xlu0 %312
      %314 = vrot.lane.b32.xlu0 %v306, 91
      %v315 = vpop.permute.xlu0 %314
      %vm316 = vcmask 744448
      %v317 = vsel %vm316, %v311, %v313
      %v318 = vsel %vm316, %v313, %v315
      %322 = vst [vmem:[#allocation2 + $0xa8] sm:$0xff] %v317
      %323 = vst [vmem:[#allocation2 + $0xb0] sm:$0xff] %v318
      %324 = vst.msk [vmem:[#allocation2 + $0xb8] sm:$0xff] %vm176, %v315
      %v325 = vld [vmem:[%s165] sm:$0xff]
      %v326 = vld [vmem:[%s165 + $0x8] sm:$0xff]
      %v327 = vld [vmem:[%s165 + $0x10] sm:$0xff]
      %331 = vrot.lane.b32.xlu0 %v325, 90
      %v332 = vpop.permute.xlu0 %331
      %333 = vrot.lane.b32.xlu0 %v326, 90
      %v334 = vpop.permute.xlu0 %333
      %335 = vrot.lane.b32.xlu0 %v327, 90
      %v336 = vpop.permute.xlu0 %335
      %vm337 = vcmask 736256
      %v338 = vsel %vm337, %v332, %v334
      %v339 = vsel %vm337, %v334, %v336
      %343 = vst [vmem:[#allocation2 + $0xc0] sm:$0xff] %v338
      %344 = vst [vmem:[#allocation2 + $0xc8] sm:$0xff] %v339
      %345 = vst.msk [vmem:[#allocation2 + $0xd0] sm:$0xff] %vm176, %v336
      %v346 = vld [vmem:[%s1] sm:$0xff]
      %v347 = vld [vmem:[%s1 + $0x8] sm:$0xff]
      %v348 = vld [vmem:[#allocation2] sm:$0xff]
      %v349 = vld [vmem:[#allocation2 + $0x8] sm:$0xff]
      %v350 = vld [vmem:[#allocation2 + $0x10] sm:$0xff]
      %v351 = vld [vmem:[#allocation2 + $0x18] sm:$0xff]
      %v352 = vld [vmem:[#allocation2 + $0x20] sm:$0xff]
      %v353 = vld [vmem:[#allocation2 + $0x28] sm:$0xff]
      %v354 = vld [vmem:[#allocation2 + $0x30] sm:$0xff]
      %v355 = vld [vmem:[#allocation2 + $0x38] sm:$0xff]
      %v356 = vld [vmem:[#allocation2 + $0x40] sm:$0xff]
      %v357 = vld [vmem:[#allocation2 + $0x48] sm:$0xff]
      %v358 = vld [vmem:[#allocation2 + $0x50] sm:$0xff]
      %v359 = vld [vmem:[#allocation2 + $0x58] sm:$0xff]
      %v360 = vld [vmem:[#allocation2 + $0x60] sm:$0xff]
      %v361 = vld [vmem:[#allocation2 + $0x68] sm:$0xff]
      %v362 = vld [vmem:[#allocation2 + $0x70] sm:$0xff]
      %v363 = vld [vmem:[#allocation2 + $0x78] sm:$0xff]
      %v364 = vld [vmem:[#allocation2 + $0x80] sm:$0xff]
      %v365 = vld [vmem:[#allocation2 + $0x88] sm:$0xff]
      %v366 = vld [vmem:[#allocation2 + $0x90] sm:$0xff]
      %v367 = vld [vmem:[#allocation2 + $0x98] sm:$0xff]
      %v368 = vld [vmem:[#allocation2 + $0xa0] sm:$0xff]
      %v369 = vld [vmem:[#allocation2 + $0xa8] sm:$0xff]
      %v370 = vld [vmem:[#allocation2 + $0xb0] sm:$0xff]
      %v371 = vld [vmem:[#allocation2 + $0xb8] sm:$0xff]
      %v372 = vld [vmem:[#allocation2 + $0xc0] sm:$0xff]
      %v373 = vld [vmem:[#allocation2 + $0xc8] sm:$0xff]
      %v374 = vld [vmem:[#allocation2 + $0xd0] sm:$0xff]
      %v375 = vld [vmem:[%s2] sm:$0xff]
      %v376 = vld [vmem:[%s2 + $0x8] sm:$0xff]
      %378 = vset.pattern.permute.xlu0 0
      %379 = vperm.xlu0 %378, %v375
      %v380 = vpop.permute.xlu0 %379
      %383 = vset.pattern.permute.xlu0 0
      %384 = vperm.xlu0 %383, %v376
      %v385 = vpop.permute.xlu0 %384
      %vm387 = vcmask 588800
      %v389 = vsel %vm387, %v346, 0
      %v392 = vsel %vm387, %v347, 0
      %394 = vmatprep.subr.mxu0 0.0
      %395 = vmatpush1.msra.mxu0 0.0
      %396 = vmatprep.subr.mxu0 0.0
      %397 = vmatpush1.msra.mxu0 0.0
      %398 = vmatprep.subr.mxu0 0.0
      %399 = vmatpush1.msra.mxu0 0.0
      %400 = vmatprep.subr.mxu0 0.0
      %401 = vmatpush1.msra.mxu0 0.0
      %402 = vmatprep.subr.mxu0 0.0
      %403 = vmatpush1.msra.mxu0 0.0
      %404 = vmatprep.subr.mxu0 0.0
      %405 = vmatpush1.msra.mxu0 0.0
      %406 = vmatprep.subr.mxu0 0.0
      %407 = vmatpush1.msra.mxu0 0.0
      %408 = vmatprep.subr.mxu0 %v373
      %409 = vmatpush1.msra.mxu0 %v372
      %410 = vmatprep.subr.mxu0 %v370
      %411 = vmatpush1.msra.mxu0 %v369
      %412 = vmatprep.subr.mxu0 %v367
      %413 = vmatpush1.msra.mxu0 %v366
      %414 = vmatprep.subr.mxu0 %v364
      %415 = vmatpush1.msra.mxu0 %v363
      %416 = vmatprep.subr.mxu0 %v361
      %417 = vmatpush1.msra.mxu0 %v360
      %418 = vmatprep.subr.mxu0 %v358
      %419 = vmatpush1.msra.mxu0 %v357
      %420 = vmatprep.subr.mxu0 %v355
      %421 = vmatpush1.msra.mxu0 %v354
      %422 = vmatprep.subr.mxu0 %v352
      %423 = vmatpush1.msra.mxu0 %v351
      %424 = vmatprep.subr.mxu0 %v349
      %425 = vmatpush1.msra.mxu0 %v348
      %426 = vmatprep.subr.mxu0 0.0
      %427 = vmatpush2.msra.mxu0 0.0
      %428 = vmatprep.subr.mxu0 0.0
      %429 = vmatpush2.msra.mxu0 0.0
      %430 = vmatprep.subr.mxu0 0.0
      %431 = vmatpush2.msra.mxu0 0.0
      %432 = vmatprep.subr.mxu0 0.0
      %433 = vmatpush2.msra.mxu0 0.0
      %434 = vmatprep.subr.mxu0 0.0
      %435 = vmatpush2.msra.mxu0 0.0
      %436 = vmatprep.subr.mxu0 0.0
      %437 = vmatpush2.msra.mxu0 0.0
      %438 = vmatprep.subr.mxu0 0.0
      %439 = vmatpush2.msra.mxu0 0.0
      %440 = vmatprep.subr.mxu0 0.0
      %441 = vmatpush2.msra.mxu0 0.0
      %442 = vmatprep.subr.mxu0 0.0
      %443 = vmatpush2.msra.mxu0 0.0
      %444 = vmatprep.subr.mxu0 0.0
      %445 = vmatpush2.msra.mxu0 0.0
      %446 = vmatprep.subr.mxu0 0.0
      %447 = vmatpush2.msra.mxu0 0.0
      %448 = vmatprep.subr.mxu0 0.0
      %449 = vmatpush2.msra.mxu0 0.0
      %450 = vmatprep.subr.mxu0 0.0
      %451 = vmatpush2.msra.mxu0 0.0
      %452 = vmatprep.subr.mxu0 0.0
      %453 = vmatpush2.msra.mxu0 0.0
      %454 = vmatprep.subr.mxu0 0.0
      %455 = vmatpush2.msra.mxu0 0.0
      %456 = vmatprep.subr.mxu0 0.0
      %457 = vmatpush2.msra.mxu0 0.0
      %458 = vmatprep.mubr.f32.mxu0 0.0
      %459 = vmatmul.mubr.f32.gmra.mxu0 %v389
      %v460 = vpop.f32.mrf.mxu0
      %v461 = vadd.f32 %v380, %v460
      %v462 = vpop.f32.mrf.mxu0
      %v463 = vadd.f32 %v380, %v462
      %464 = vmatprep.mubr.f32.mxu0 0.0
      %465 = vmatmul.mubr.f32.gmra.mxu0 %v392
      %v466 = vpop.f32.mrf.mxu0
      %v467 = vadd.f32 %v385, %v466
      %v468 = vpop.f32.mrf.mxu0
      %v469 = vadd.f32 %v385, %v468
      %470 = vdwg.mxu0
      %471 = vmatprep.subr.mxu0 0.0
      %472 = vmatpush1.msra.mxu0 0.0
      %473 = vmatprep.subr.mxu0 0.0
      %474 = vmatpush1.msra.mxu0 0.0
      %475 = vmatprep.subr.mxu0 0.0
      %476 = vmatpush1.msra.mxu0 0.0
      %477 = vmatprep.subr.mxu0 0.0
      %478 = vmatpush1.msra.mxu0 0.0
      %479 = vmatprep.subr.mxu0 0.0
      %480 = vmatpush1.msra.mxu0 0.0
      %481 = vmatprep.subr.mxu0 0.0
      %482 = vmatpush1.msra.mxu0 0.0
      %483 = vmatprep.subr.mxu0 0.0
      %484 = vmatpush1.msra.mxu0 0.0
      %485 = vmatprep.subr.mxu0 0.0
      %486 = vmatpush1.msra.mxu0 %v374
      %487 = vmatprep.subr.mxu0 0.0
      %488 = vmatpush1.msra.mxu0 %v371
      %489 = vmatprep.subr.mxu0 0.0
      %490 = vmatpush1.msra.mxu0 %v368
      %491 = vmatprep.subr.mxu0 0.0
      %492 = vmatpush1.msra.mxu0 %v365
      %493 = vmatprep.subr.mxu0 0.0
      %494 = vmatpush1.msra.mxu0 %v362
      %495 = vmatprep.subr.mxu0 0.0
      %496 = vmatpush1.msra.mxu0 %v359
      %497 = vmatprep.subr.mxu0 0.0
      %498 = vmatpush1.msra.mxu0 %v356
      %499 = vmatprep.subr.mxu0 0.0
      %500 = vmatpush1.msra.mxu0 %v353
      %501 = vmatprep.subr.mxu0 0.0
      %502 = vmatpush1.msra.mxu0 %v350
      %503 = vmatprep.subr.mxu0 0.0
      %504 = vmatpush2.msra.mxu0 0.0
      %505 = vmatprep.subr.mxu0 0.0
      %506 = vmatpush2.msra.mxu0 0.0
      %507 = vmatprep.subr.mxu0 0.0
      %508 = vmatpush2.msra.mxu0 0.0
      %509 = vmatprep.subr.mxu0 0.0
      %510 = vmatpush2.msra.mxu0 0.0
      %511 = vmatprep.subr.mxu0 0.0
      %512 = vmatpush2.msra.mxu0 0.0
      %513 = vmatprep.subr.mxu0 0.0
      %514 = vmatpush2.msra.mxu0 0.0
      %515 = vmatprep.subr.mxu0 0.0
      %516 = vmatpush2.msra.mxu0 0.0
      %517 = vmatprep.subr.mxu0 0.0
      %518 = vmatpush2.msra.mxu0 0.0
      %519 = vmatprep.subr.mxu0 0.0
      %520 = vmatpush2.msra.mxu0 0.0
      %521 = vmatprep.subr.mxu0 0.0
      %522 = vmatpush2.msra.mxu0 0.0
      %523 = vmatprep.subr.mxu0 0.0
      %524 = vmatpush2.msra.mxu0 0.0
      %525 = vmatprep.subr.mxu0 0.0
      %526 = vmatpush2.msra.mxu0 0.0
      %527 = vmatprep.subr.mxu0 0.0
      %528 = vmatpush2.msra.mxu0 0.0
      %529 = vmatprep.subr.mxu0 0.0
      %530 = vmatpush2.msra.mxu0 0.0
      %531 = vmatprep.subr.mxu0 0.0
      %532 = vmatpush2.msra.mxu0 0.0
      %533 = vmatprep.subr.mxu0 0.0
      %534 = vmatpush2.msra.mxu0 0.0
      %535 = vmatprep.mubr.f32.mxu0 0.0
      %536 = vmatmul.mubr.f32.gmra.mxu0 %v389
      %v537 = vpop.f32.mrf.mxu0
      %v538 = vadd.f32 %v380, %v537
      %v539 = vpop.f32.mrf.mxu0
      %540 = vmatprep.mubr.f32.mxu0 0.0
      %541 = vmatmul.mubr.f32.gmra.mxu0 %v392
      %v542 = vpop.f32.mrf.mxu0
      %v543 = vadd.f32 %v385, %v542
      %v544 = vpop.f32.mrf.mxu0
      %545 = vdwg.mxu0
      %v546 = vmax.f32 %v461, %v467
      %v547 = vmax.f32 %v463, %v469
      %v548 = vmax.f32 %v538, %v543
      %vm549 = vcmask 130048
      %550 = vst.msk [vmem:[%s170] sm:$0xff] %vm549, %v546
      %552 = vrot.lane.b32.xlu0 %v546, 126
      %v553 = vpop.permute.xlu0 %552
      %vm555 = vcmask 261248
      %556 = vst.msk [vmem:[%s170] sm:$0xff] %vm555, %v553
      %557 = vrot.lane.b32.xlu0 %v546, 124
      %v558 = vpop.permute.xlu0 %557
      %vm560 = vcmask 392448
      %561 = vst.msk [vmem:[%s170] sm:$0xff] %vm560, %v558
      %562 = vrot.lane.b32.xlu0 %v546, 122
      %v563 = vpop.permute.xlu0 %562
      %vm565 = vcmask 523648
      %566 = vst.msk [vmem:[%s170] sm:$0xff] %vm565, %v563
      %567 = vrot.lane.b32.xlu0 %v546, 120
      %v568 = vpop.permute.xlu0 %567
      %vm570 = vcmask 654848
      %571 = vst.msk [vmem:[%s170] sm:$0xff] %vm570, %v568
      %572 = vrot.lane.b32.xlu0 %v546, 118
      %v573 = vpop.permute.xlu0 %572
      %vm575 = vcmask 786048
      %576 = vst.msk [vmem:[%s170] sm:$0xff] %vm575, %v573
      %577 = vrot.lane.b32.xlu0 %v546, 116
      %v578 = vpop.permute.xlu0 %577
      %vm580 = vcmask 917248
      %581 = vst.msk [vmem:[%s170] sm:$0xff] %vm580, %v578
      %583 = vrot.lane.b32.xlu0 %v546, 114
      %v584 = vpop.permute.xlu0 %583
      %585 = vrot.lane.b32.xlu0 %v547, 114
      %v586 = vpop.permute.xlu0 %585
      %vm587 = vcmask 932864
      %v588 = vsel %vm587, %v584, %v586
      %vm590 = vcmask 1048448
      %591 = vst.msk [vmem:[%s170] sm:$0xff] %vm590, %v588
      %592 = vrot.lane.b32.xlu0 %v547, 112
      %v593 = vpop.permute.xlu0 %592
      %595 = vst.msk [vmem:[%s170 + $0x8] sm:$0xff] %vm549, %v593
      %596 = vrot.lane.b32.xlu0 %v547, 110
      %v597 = vpop.permute.xlu0 %596
      %599 = vst.msk [vmem:[%s170 + $0x8] sm:$0xff] %vm555, %v597
      %600 = vrot.lane.b32.xlu0 %v547, 108
      %v601 = vpop.permute.xlu0 %600
      %603 = vst.msk [vmem:[%s170 + $0x8] sm:$0xff] %vm560, %v601
      %604 = vrot.lane.b32.xlu0 %v547, 106
      %v605 = vpop.permute.xlu0 %604
      %607 = vst.msk [vmem:[%s170 + $0x8] sm:$0xff] %vm565, %v605
      %608 = vrot.lane.b32.xlu0 %v547, 104
      %v609 = vpop.permute.xlu0 %608
      %611 = vst.msk [vmem:[%s170 + $0x8] sm:$0xff] %vm570, %v609
      %612 = vrot.lane.b32.xlu0 %v547, 102
      %v613 = vpop.permute.xlu0 %612
      %615 = vst.msk [vmem:[%s170 + $0x8] sm:$0xff] %vm575, %v613
      %617 = vrot.lane.b32.xlu0 %v547, 100
      %v618 = vpop.permute.xlu0 %617
      %619 = vrot.lane.b32.xlu0 %v548, 100
      %v620 = vpop.permute.xlu0 %619
      %vm621 = vcmask 818176
      %v622 = vsel %vm621, %v618, %v620
      %624 = vst.msk [vmem:[%s170 + $0x8] sm:$0xff] %vm580, %v622
      %625 = vrot.lane.b32.xlu0 %v548, 98
      %v626 = vpop.permute.xlu0 %625
      %628 = vst.msk [vmem:[%s170 + $0x8] sm:$0xff] %vm590, %v626
      %p629 = scmp.lt.s32.totalorder %s14, 1
      %s630 = scalar_select %p629, %s14, 1
      %s631 = smul.addr %s630, 2
      %s632 = smul.addr %s631, 8
      %s633 = scalar_lea.vmem %s3, %s632
      // Predicated region
      $region33: #{mfm_forward.1} parent=31 // pred_check
        %p634 = pneg %p100
      $region34: #{mfm_forward.1} parent=31 // pred_check_branch
        %636 = sbr.rel (%p634) target = $region36
      $region35: #{mfm_forward.1} parent=31 // pred_region
        _
      $region36: #{mfm_forward.1} parent=31 // pred_fallthru
        _
    $region32: #{mfm_forward.1} parent=5 // pred_fallthru
      _
    %p637 = scmp.le.s32.totalorder 2, %s9
    // Predicated region
    $region37: #{mfm_forward.1} parent=5 // pred_check
      %p638 = pneg %p637
    $region38: #{mfm_forward.1} parent=5 // pred_check_branch
      %640 = sbr.rel (%p638) target = $region40
    $region39: #{mfm_forward.1} parent=5 // pred_region
      %s641 = ssub.s32 %s9, 2
      // Predicated region
      $region41: #{mfm_forward.1} parent=39 // pred_check
        %p642 = pneg %p106
      $region42: #{mfm_forward.1} parent=39 // pred_check_branch
        %644 = sbr.rel (%p642) target = $region44
      $region43: #{mfm_forward.1} parent=39 // pred_region
        %p645 = scmp.lt.s32.totalorder %s15, 1
        %s646 = scalar_select %p645, %s15, 1
        %s647 = smul.addr %s646, 2
        %s648 = smul.addr %s647, 8
        %s649 = scalar_lea.vmem %s3, %s648
      $region44: #{mfm_forward.1} parent=39 // pred_fallthru
        _
    $region40: #{mfm_forward.1} parent=5 // pred_fallthru
      _
  $region6: #{mfm_forward.1} parent=0 // loop_footer
    %s13 = sadd.s32 1, %s9
  $region7: #{mfm_forward.1} parent=0 // loop_footer_branch
    %8 = sbr.rel target = $region3
  $region8: #{mfm_forward.1} parent=0 // loop_exit
    _

</llo_original>
